<compile_context>
chip_gen: v6e
topology: v6e:2x2x1
jax: 0.10.0
libtpu: 0.0.40
codegen_flags: <defaults>
</compile_context>

<pallas_src>
import functools

import jax
import jax.numpy as jnp
from jax import lax
from jax.experimental import pallas as pl
from jax.experimental.pallas import tpu as pltpu


# ----------------------------------------------------------------------------
# Fused 3x3 conv + bias + ReLU kernel (direct conv on row-flattened activations)
# ----------------------------------------------------------------------------
def _conv3x3_kernel(cur_ref, nxt_ref, w_ref, b_ref, o_ref, *, offsets, upcast):
    """cur/nxt: (1, tm, Ck) bf16 blocks i and i+1 of the flat padded activation.
    w: (T, K, Cout) bf16 (VMEM resident), b: (1, Cout) f32, o: (1, tm, Cout) bf16.
    offsets: static tuple (per tap) of static row offsets to slice from the
    2*tm-row window; multiple offsets per tap are lane-concatenated (aligned)."""
    tm = cur_ref.shape[1]
    x2 = jnp.concatenate([cur_ref[0], nxt_ref[0]], axis=0)        # (2*tm, Ck)
    if upcast:
        # Unaligned sublane offsets: slice in f32 (robust layout), cast back
        # to bf16 right before the MXU.
        x2 = x2.astype(jnp.float32)
    acc = None
    for t, offs in enumerate(offsets):
        parts = [x2[o:o + tm, :].astype(jnp.bfloat16) for o in offs]
        lhs = parts[0] if len(parts) == 1 else jnp.concatenate(parts, axis=1)
        contrib = jnp.dot(lhs, w_ref[t], preferred_element_type=jnp.float32)
        acc = contrib if acc is None else acc + contrib
    out = jnp.maximum(acc + b_ref[...], 0.0)                      # bias + ReLU
    o_ref[0] = out.astype(o_ref.dtype)


def _round_up(v, m):
    return -(-v // m) * m


def _pick_tm(m_rows, max_off, ck):
    """Choose a row tile: large enough that each grid step has real MXU work
    (~256K activation elements) and that the 2-block window covers the halo."""
    lo = max(max_off, 16)
    target = max(256, min(4096, (256 * 1024) // ck))
    target = max(target, lo)
    nt = max(1, -(-m_rows // target))
    tm = _round_up(-(-m_rows // nt), 16)
    if tm < lo:
        tm = _round_up(lo, 16)
    return tm


def conv3x3_relu(x, w, bias):
    """x: (B, H, W, Cin) bf16; w: (3, 3, Cin, Cout) bf16; bias: (1, Cout) f32."""
    B, H, W, Cin = x.shape
    Cout = w.shape[-1]
    xp = jnp.pad(x, ((0, 0), (1, 1), (1, 1), (0, 0)))             # zero border

    if Cin >= 128:
        # Fully fused: all 9 taps resolved in-kernel; per-kernel-row channel
        # blocks are lane-concatenated in VMEM (aligned since Cin % 128 == 0).
        xe = xp                                                   # (B, H+2, W+2, Cin)
        L = W + 2
        offsets = tuple(tuple(dy * L + dx for dx in range(3)) for dy in range(3))
        wk = w.reshape(3, 3 * Cin, Cout)
        crop_w = True                    # each output row carries 2 junk columns
    elif Cin > 3:
        # Cin == 64: pre-gather the 3 x-taps into channels (3x, small), so every
        # in-kernel shift is a multiple of the row length (aligned, no junk cols).
        xe = jnp.concatenate([xp[:, :, dx:dx + W, :] for dx in range(3)], axis=-1)
        L = W
        offsets = tuple((dy * L,) for dy in range(3))
        wk = w.reshape(3, 3 * Cin, Cout)
        crop_w = False
    else:
        # First layer (Cin == 3): full im2col in the wrapper is only ~2.7 MB.
        xe = jnp.concatenate(
            [xp[:, dy:dy + H, dx:dx + W, :] for dy in range(3) for dx in range(3)],
            axis=-1)
        L = W
        offsets = ((0,),)
        wk = w.reshape(1, 9 * Cin, Cout)
        crop_w = False

    Ck = xe.shape[-1]
    Bh = xe.shape[1]
    M = H * L                                   # flattened output rows per image
    max_off = max(max(t) for t in offsets)
    tm = _pick_tm(M, max_off, Ck)
    Mt = -(-M // tm)

    # Make sure blocks 0 .. Mt (the "next" block of the last tile) fully exist.
    rows_needed = (Mt + 1) * tm
    extra_rows = -(-max(0, rows_needed - Bh * L) // L)
    if extra_rows:
        xe = jnp.pad(xe, ((0, 0), (0, extra_rows), (0, 0), (0, 0)))
    xf = xe.reshape(B, (Bh + extra_rows) * L, Ck)

    upcast = any(o % 16 for offs in offsets for o in offs)
    kernel = functools.partial(_conv3x3_kernel, offsets=offsets, upcast=upcast)
    T, K = wk.shape[0], wk.shape[1]

    out = pl.pallas_call(
        kernel,
        out_shape=jax.ShapeDtypeStruct((B, Mt * tm, Cout), x.dtype),
        grid_spec=pltpu.PrefetchScalarGridSpec(
            num_scalar_prefetch=0,
            grid=(B, Mt),
            in_specs=[
                pl.BlockSpec((1, tm, Ck), lambda b, i: (b, i, 0)),       # block i
                pl.BlockSpec((1, tm, Ck), lambda b, i: (b, i + 1, 0)),   # halo i+1
                pl.BlockSpec((T, K, Cout), lambda b, i: (0, 0, 0)),      # resident W
                pl.BlockSpec((1, Cout), lambda b, i: (0, 0)),            # bias
            ],
            out_specs=pl.BlockSpec((1, tm, Cout), lambda b, i: (b, i, 0)),
        ),
        compiler_params=pltpu.CompilerParams(
            dimension_semantics=("parallel", "parallel"),
            vmem_limit_bytes=40 * 1024 * 1024,
        ),
    )(xf, xf, wk, bias)

    out = out[:, :M, :].reshape(B, H, L, Cout)
    if crop_w:
        out = out[:, :, :W, :]
    return out


# ----------------------------------------------------------------------------
# 2x2 / stride-2 max-pool kernel (NHWC, bf16 in/out, f32 compare internally)
# ----------------------------------------------------------------------------
def _maxpool2_kernel(x_ref, o_ref):
    x = x_ref[...].astype(jnp.float32)                      # (1, TH, W, C)
    r = jnp.maximum(x[:, 0::2, :, :], x[:, 1::2, :, :])     # pool rows
    p = jnp.maximum(r[:, :, 0::2, :], r[:, :, 1::2, :])     # pool cols
    o_ref[...] = p.astype(o_ref.dtype)


def maxpool2x2(x):
    B, H, W, C = x.shape
    TH = 56 if H % 56 == 0 else H
    return pl.pallas_call(
        _maxpool2_kernel,
        out_shape=jax.ShapeDtypeStruct((B, H // 2, W // 2, C), x.dtype),
        grid_spec=pltpu.PrefetchScalarGridSpec(
            num_scalar_prefetch=0,
            grid=(B, H // TH),
            in_specs=[pl.BlockSpec((1, TH, W, C), lambda b, r: (b, r, 0, 0))],
            out_specs=pl.BlockSpec((1, TH // 2, W // 2, C), lambda b, r: (b, r, 0, 0)),
        ),
        compiler_params=pltpu.CompilerParams(
            dimension_semantics=("parallel", "parallel"),
            vmem_limit_bytes=40 * 1024 * 1024,
        ),
    )(x)


# ----------------------------------------------------------------------------
# VGG19 features[:-1] configuration and forward
# ----------------------------------------------------------------------------
VGG19_CFG = [64, 64, "M", 128, 128, "M",
             256, 256, 256, 256, "M",
             512, 512, 512, 512, "M",
             512, 512, 512, 512]          # last MaxPool removed (modules[:-1])


def init_params(key):
    """He-init of the 16 conv layers; weights bf16 (3,3,Cin,Cout), bias f32 (1,Cout)."""
    params = []
    cin = 3
    for v in VGG19_CFG:
        if v == "M":
            continue
        key, kw = jax.random.split(key)
        w = (jax.random.normal(kw, (3, 3, cin, v), jnp.float32)
             * jnp.sqrt(2.0 / (9 * cin))).astype(jnp.bfloat16)
        b = jnp.zeros((1, v), jnp.float32)
        params.append((w, b))
        cin = v
    return params


def attention_encoder_forward(x_nchw, params):
    """Reproduces AttentionEncoder.forward(x) (store_switch=False)."""
    x = jnp.transpose(x_nchw, (0, 2, 3, 1)).astype(jnp.bfloat16)   # NCHW -> NHWC
    it = iter(params)
    for v in VGG19_CFG:
        if v == "M":
            x = maxpool2x2(x)
        else:
            w, bias = next(it)
            x = conv3x3_relu(x, w, bias)
    x = jnp.transpose(x, (0, 3, 1, 2))            # back to NCHW: (B, 512, 14, 14)
    B = x.shape[0]
    # Same row-major reinterpretation as torch: (B, 512, 14, 14) -> (B, 196, 512)
    return x.reshape(B, 196, 512).astype(jnp.float32)


# TODO(synk): the `deconv` / store_switch path (MaxUnpool2d switches,
# ConvTranspose2d with tied weights) is not part of the forward hot path and is
# not implemented here.


# ----------------------------------------------------------------------------
# Small-shape correctness spot checks vs. XLA references
# ----------------------------------------------------------------------------
def _conv_ref(x, w, bias):
    y = lax.conv_general_dilated(
        x.astype(jnp.float32), w.astype(jnp.float32),
        window_strides=(1, 1), padding="SAME",
        dimension_numbers=("NHWC", "HWIO", "NHWC"))
    return jnp.maximum(y + bias.reshape(1, 1, 1, -1), 0.0)


def _check_conv(key, B, H, W, cin, cout):
    kx, kw = jax.random.split(key)
    x = jax.random.normal(kx, (B, H, W, cin), jnp.float32).astype(jnp.bfloat16)
    w = (jax.random.normal(kw, (3, 3, cin, cout), jnp.float32)
         * jnp.sqrt(2.0 / (9 * cin))).astype(jnp.bfloat16)
    bias = jnp.full((1, cout), 0.1, jnp.float32)
    got = jax.jit(conv3x3_relu)(x, w, bias).astype(jnp.float32)
    ref = _conv_ref(x, w, bias)
    err = float(jnp.max(jnp.abs(got - ref)))
    scale = float(jnp.max(jnp.abs(ref))) + 1e-6
    assert err <= 0.05 * scale + 1e-3, (err, scale)


def _check_pool(key):
    x = jax.random.normal(key, (2, 16, 16, 128), jnp.float32).astype(jnp.bfloat16)
    got = jax.jit(maxpool2x2)(x).astype(jnp.float32)
    ref = jnp.max(x.astype(jnp.float32).reshape(2, 8, 2, 8, 2, 128), axis=(2, 4))
    assert float(jnp.max(jnp.abs(got - ref))) <= 1e-3


if __name__ == "__main__":
    key = jax.random.PRNGKey(0)
    key_x, key_p, key_c1, key_c2, key_c3, key_pl = jax.random.split(key, 6)

    # Spot-check each conv code path (Cin=3 / Cin=64 / Cin>=128) and the pool.
    _check_conv(key_c1, 2, 16, 16, 3, 64)
    _check_conv(key_c2, 2, 16, 16, 64, 128)
    _check_conv(key_c3, 2, 16, 16, 128, 256)
    _check_pool(key_pl)

    # Input shape implied by the forward's reshape to (B, 196, 512): (B, 3, 224, 224).
    x = jax.random.normal(key_x, (2, 3, 224, 224), jnp.float32)
    params = init_params(key_p)

    fwd = jax.jit(attention_encoder_forward)
    out = jax.block_until_ready(fwd(x, params))

    assert out.shape == (2, 196, 512), out.shape
    assert bool(jnp.all(jnp.isfinite(out)))
    print("KERNEL_OK")
</pallas_src>

<mosaic_0001>
module attributes {stable_mosaic.version = 11 : i64} {
  func.func @_conv3x3_kernel(%arg0: i32, %arg1: i32, %arg2: memref<1x256x27xbf16, #tpu.memory_space<vmem>>, %arg3: memref<1x256x27xbf16, #tpu.memory_space<vmem>>, %arg4: memref<1x27x64xbf16, #tpu.memory_space<vmem>>, %arg5: memref<1x64xf32, #tpu.memory_space<vmem>>, %arg6: memref<1x256x64xbf16, #tpu.memory_space<vmem>>) attributes {dimension_semantics = [#tpu.dimension_semantics<parallel>, #tpu.dimension_semantics<parallel>], iteration_bounds = array<i64: 2, 1>, scalar_prefetch = 0 : i64, scratch_operands = 0 : i64, tpu.core_type = #tpu.core_type<tc>, window_params = [{transform_indices = @transform_0, window_bounds = array<i64: 1, 256, 27>}, {transform_indices = @transform_1, window_bounds = array<i64: 1, 256, 27>}, {pipeline_mode = #tpu.pipeline_mode<synchronous>, transform_indices = @transform_2, window_bounds = array<i64: 1, 27, 64>}, {pipeline_mode = #tpu.pipeline_mode<synchronous>, transform_indices = @transform_3, window_bounds = array<i64: 1, 64>}, {transform_indices = @transform_4, window_bounds = array<i64: 1, 256, 64>}]} {
    %c0 = arith.constant 0 : index
    %c0_0 = arith.constant 0 : index
    %c0_1 = arith.constant 0 : index
    %0 = vector.load %arg2[%c0, %c0_0, %c0_1] : memref<1x256x27xbf16, #tpu.memory_space<vmem>>, vector<1x256x27xbf16>
    %1 = vector.shape_cast %0 : vector<1x256x27xbf16> to vector<256x27xbf16>
    %c0_2 = arith.constant 0 : index
    %c0_3 = arith.constant 0 : index
    %c0_4 = arith.constant 0 : index
    %2 = vector.load %arg3[%c0_2, %c0_3, %c0_4] : memref<1x256x27xbf16, #tpu.memory_space<vmem>>, vector<1x256x27xbf16>
    %3 = vector.shape_cast %2 : vector<1x256x27xbf16> to vector<256x27xbf16>
    %4 = tpu.concatenate %1, %3 in 0 : vector<256x27xbf16>, vector<256x27xbf16> -> vector<512x27xbf16>
    %5 = vector.extract_strided_slice %4 {offsets = [0, 0], sizes = [256, 27], strides = [1, 1]} : vector<512x27xbf16> to vector<256x27xbf16>
    %c0_5 = arith.constant 0 : index
    %c0_6 = arith.constant 0 : index
    %c0_7 = arith.constant 0 : index
    %6 = vector.load %arg4[%c0_5, %c0_6, %c0_7] : memref<1x27x64xbf16, #tpu.memory_space<vmem>>, vector<1x27x64xbf16>
    %7 = vector.shape_cast %6 : vector<1x27x64xbf16> to vector<27x64xbf16>
    %cst = arith.constant dense<0.000000e+00> : vector<256x64xf32>
    %8 = tpu.matmul %5, %7, %cst {dimension_numbers = #tpu.dot_dimension_numbers<[1], [0], [0], [1], [0, 0, 1, 1], [], []>} : vector<256x27xbf16>, vector<27x64xbf16>, vector<256x64xf32> -> vector<256x64xf32>
    %c0_8 = arith.constant 0 : index
    %c0_9 = arith.constant 0 : index
    %9 = vector.load %arg5[%c0_8, %c0_9] : memref<1x64xf32, #tpu.memory_space<vmem>>, vector<1x64xf32>
    %10 = vector.broadcast %9 : vector<1x64xf32> to vector<256x64xf32>
    %11 = arith.addf %8, %10 : vector<256x64xf32>
    %cst_10 = arith.constant 0.000000e+00 : f32
    %12 = vector.broadcast %cst_10 : f32 to vector<256x64xf32>
    %13 = arith.maximumf %11, %12 : vector<256x64xf32>
    %14 = arith.truncf %13 : vector<256x64xf32> to vector<256x64xbf16>
    %c0_11 = arith.constant 0 : index
    %c0_12 = arith.constant 0 : index
    %c0_13 = arith.constant 0 : index
    %15 = vector.load %arg6[%c0_11, %c0_12, %c0_13] : memref<1x256x64xbf16, #tpu.memory_space<vmem>>, vector<1x256x64xbf16>
    %16 = vector.shape_cast %15 : vector<1x256x64xbf16> to vector<256x64xbf16>
    %17 = vector.shape_cast %14 : vector<256x64xbf16> to vector<1x256x64xbf16>
    tpu.vector_store %arg6[%c0_11, %c0_12, %c0_13], %17 {strides = array<i32>} : memref<1x256x64xbf16, #tpu.memory_space<vmem>>, vector<1x256x64xbf16>,
    return
  }
  func.func @transform_0(%arg0: i32, %arg1: i32) -> (i32, i32, i32) {
    %c0_i32 = arith.constant 0 : i32
    %c0_i32_0 = arith.constant 0 : i32
    return %arg0, %arg1, %c0_i32 : i32, i32, i32
  }
  func.func @transform_1(%arg0: i32, %arg1: i32) -> (i32, i32, i32) {
    %c1_i32 = arith.constant 1 : i32
    %0 = arith.addi %arg1, %c1_i32 : i32
    %c0_i32 = arith.constant 0 : i32
    %c0_i32_0 = arith.constant 0 : i32
    return %arg0, %0, %c0_i32 : i32, i32, i32
  }
  func.func @transform_2(%arg0: i32, %arg1: i32) -> (i32, i32, i32) {
    %c0_i32 = arith.constant 0 : i32
    %c0_i32_0 = arith.constant 0 : i32
    %c0_i32_1 = arith.constant 0 : i32
    %c0_i32_2 = arith.constant 0 : i32
    return %c0_i32, %c0_i32_0, %c0_i32_1 : i32, i32, i32
  }
  func.func @transform_3(%arg0: i32, %arg1: i32) -> (i32, i32) {
    %c0_i32 = arith.constant 0 : i32
    %c0_i32_0 = arith.constant 0 : i32
    %c0_i32_1 = arith.constant 0 : i32
    return %c0_i32, %c0_i32_0 : i32, i32
  }
  func.func @transform_4(%arg0: i32, %arg1: i32) -> (i32, i32, i32) {
    %c0_i32 = arith.constant 0 : i32
    %c0_i32_0 = arith.constant 0 : i32
    return %arg0, %arg1, %c0_i32 : i32, i32, i32
  }
}

</mosaic_0001>

<llo_original>
// kernel: conv3x3_relu.1
$region0: #{conv3x3_relu.1}
  #allocation0 [shape = 'u32[]', space=smem, size = 0x4, offset = 0x4, fixed_abs, tag = 'smem constant byte address 0x4 - core index']
  #allocation1 [shape = 'u32[144,128]{1,0:T(1,128)}', space=vmem, size = 0x12000, scoped, tag = 'internal scratch']
  %s0 = inlined_call_operand.vmem [shape: bf16[2,512,27], index: 0, kind: input, shape index: {}, may-alias: {0,1}]
  %s1 = inlined_call_operand.vmem [shape: bf16[2,512,27], index: 1, kind: input, shape index: {}, may-alias: {0,1}]
  %s2 = inlined_call_operand.vmem [shape: bf16[1,27,64], index: 2, kind: input, shape index: {}]
  %s3 = inlined_call_operand.vmem [shape: f32[1,64], index: 3, kind: input, shape index: {}]
  %s4 = inlined_call_operand.hbm [shape: bf16[2,256,64], index: 4, kind: output, shape index: {}]
  %s5 = sld [smem:[#allocation0]]
  $region49: #{conv3x3_relu.1} parent=0
    _
  %s7 = ssub.s32 1, %s5
  %s8 = scalar_select 0, %s7, %s5
  $region1: #{conv3x3_relu.1} parent=0
    #allocation2 [shape = 'u8[131072]{0}', space=vmem, size = 0x20000, scoped, tag = 'output window, operand 0']
    #allocation3 [shape = 's32[2]{0}', space=sflag, size = 0x8, scoped, tag = 'scoped memory for conv3x3_relu.1']
    %9 = vsyncpa [#allocation3], 0
    %s10 = scalar_lea.sflag [#allocation3], 1
    %11 = vsyncpa %s10, 0
    loop: start=0, step=1, limit=4
    $region2: #{conv3x3_relu.1} parent=1 // loop_pre_header
      _
    $region3: #{conv3x3_relu.1} parent=1 // loop_header
      %s13 = sphi 0, %s17
      %p14 = scmp.ge.s32.totalorder %s13, 4
      %s20 = sphi 0, %s32
      %s21 = sphi 0, %s28
      %s22 = sphi 0, %s20
      %s23 = sphi 0, %s21
      %s24 = sphi 0, %s22
      %s25 = sphi 0, %s23
      %s37 = sphi 0, %s39
      %s40 = sphi 0, %s37
      %s41 = sphi 0, %s40
      %s57 = sphi 0, %s41
      %s67 = sphi 0, %s69
      %s70 = sphi 0, %s67
      %s71 = sphi 0, %s70
      %s87 = sphi 0, %s71
      %s91 = sphi 0, %s91
      %s93 = sphi 0, %s91
      %s94 = sphi 0, %s93
      %s108 = sphi 0, %s94
      %s112 = sphi 0, %s112
      %s114 = sphi 0, %s112
      %s115 = sphi 0, %s114
      %s129 = sphi 0, %s115
      %s137 = sphi 0, %s139
      %s140 = sphi 0, %s137
      %s141 = sphi 0, %s140
      %s157 = sphi 0, %s141
    $region4: #{conv3x3_relu.1} parent=1 // loop_header_branch
      %16 = sbr.rel (%p14) target = $region8
    $region5: #{conv3x3_relu.1} parent=1 // loop_body
      %s18 = ssub.s32 %s13, 1
      %s19 = ssub.s32 %s13, 2
      %s26 = sadd.s32 1, %s21
      %p27 = scmp.ge.s32.totalorder %s26, 1
      %s28 = scalar_select %p27, 0, %s26
      %s29 = sadd.s32 1, %s20
      %s30 = scalar_select %p27, %s29, %s20
      %p31 = scmp.ge.s32.totalorder %s30, 2
      %s32 = scalar_select %p31, 0, %s30
      %s33 = ssub.s32 %s20, %s32
      %s34 = ssub.s32 %s21, %s28
      %s35 = sor.u32 %s33, %s34
      %p36 = scmp.eq.s32.totalorder %s35, 0
      %s38 = sadd.s32 %s37, 1
      %s39 = scalar_select %p36, %s37, %s38
      %p42 = pneg %p36
      %p43 = scmp.eq.s32.totalorder %s13, 1
      %p44 = por %p42, %p43
      %p45 = scmp.ne.s32.totalorder %s37, %s40
      %p46 = scmp.eq.s32.totalorder %s13, 0
      %p47 = por %p45, %p46
      %p48 = scmp.ne.s32.totalorder %s37, %s40
      %p49 = scmp.eq.s32.totalorder %s18, 1
      %p50 = por %p48, %p49
      %p51 = scmp.ne.s32.totalorder %s40, %s41
      %p52 = scmp.eq.s32.totalorder %s18, 0
      %p53 = por %p51, %p52
      %p54 = scmp.ne.s32.totalorder %s40, %s41
      %p55 = scmp.eq.s32.totalorder %s19, 1
      %p56 = por %p54, %p55
      %p58 = scmp.ne.s32.totalorder %s41, %s57
      %p59 = scmp.eq.s32.totalorder %s19, 0
      %p60 = por %p58, %p59
      %s61 = sadd.s32 %s21, 1
      %s62 = sadd.s32 %s28, 1
      %s63 = ssub.s32 %s20, %s32
      %s64 = ssub.s32 %s61, %s62
      %s65 = sor.u32 %s63, %s64
      %p66 = scmp.eq.s32.totalorder %s65, 0
      %s68 = sadd.s32 %s67, 1
      %s69 = scalar_select %p66, %s67, %s68
      %p72 = pneg %p66
      %p73 = scmp.eq.s32.totalorder %s13, 1
      %p74 = por %p72, %p73
      %p75 = scmp.ne.s32.totalorder %s67, %s70
      %p76 = scmp.eq.s32.totalorder %s13, 0
      %p77 = por %p75, %p76
      %p78 = scmp.ne.s32.totalorder %s67, %s70
      %p79 = scmp.eq.s32.totalorder %s18, 1
      %p80 = por %p78, %p79
      %p81 = scmp.ne.s32.totalorder %s70, %s71
      %p82 = scmp.eq.s32.totalorder %s18, 0
      %p83 = por %p81, %p82
      %p84 = scmp.ne.s32.totalorder %s70, %s71
      %p85 = scmp.eq.s32.totalorder %s19, 1
      %p86 = por %p84, %p85
      %p88 = scmp.ne.s32.totalorder %s71, %s87
      %p89 = scmp.eq.s32.totalorder %s19, 0
      %p90 = por %p88, %p89
      %s92 = sadd.s32 %s91, 1
      %p95 = scmp.eq.s32.totalorder %s13, 1
      %p96 = scmp.ne.s32.totalorder %s91, %s93
      %p97 = scmp.eq.s32.totalorder %s13, 0
      %p98 = por %p96, %p97
      %p99 = scmp.ne.s32.totalorder %s91, %s93
      %p100 = scmp.eq.s32.totalorder %s18, 1
      %p101 = por %p99, %p100
      %p102 = scmp.ne.s32.totalorder %s93, %s94
      %p103 = scmp.eq.s32.totalorder %s18, 0
      %p104 = por %p102, %p103
      %p105 = scmp.ne.s32.totalorder %s93, %s94
      %p106 = scmp.eq.s32.totalorder %s19, 1
      %p107 = por %p105, %p106
      %p109 = scmp.ne.s32.totalorder %s94, %s108
      %p110 = scmp.eq.s32.totalorder %s19, 0
      %p111 = por %p109, %p110
      %s113 = sadd.s32 %s112, 1
      %p116 = scmp.eq.s32.totalorder %s13, 1
      %p117 = scmp.ne.s32.totalorder %s112, %s114
      %p118 = scmp.eq.s32.totalorder %s13, 0
      %p119 = por %p117, %p118
      %p120 = scmp.ne.s32.totalorder %s112, %s114
      %p121 = scmp.eq.s32.totalorder %s18, 1
      %p122 = por %p120, %p121
      %p123 = scmp.ne.s32.totalorder %s114, %s115
      %p124 = scmp.eq.s32.totalorder %s18, 0
      %p125 = por %p123, %p124
      %p126 = scmp.ne.s32.totalorder %s114, %s115
      %p127 = scmp.eq.s32.totalorder %s19, 1
      %p128 = por %p126, %p127
      %p130 = scmp.ne.s32.totalorder %s115, %s129
      %p131 = scmp.eq.s32.totalorder %s19, 0
      %p132 = por %p130, %p131
      %s133 = ssub.s32 %s20, %s32
      %s134 = ssub.s32 %s21, %s28
      %s135 = sor.u32 %s133, %s134
      %p136 = scmp.eq.s32.totalorder %s135, 0
      %s138 = sadd.s32 %s137, 1
      %s139 = scalar_select %p136, %s137, %s138
      %p142 = pneg %p136
      %p143 = scmp.eq.s32.totalorder %s13, 1
      %p144 = por %p142, %p143
      %p145 = scmp.ne.s32.totalorder %s137, %s140
      %p146 = scmp.eq.s32.totalorder %s13, 0
      %p147 = por %p145, %p146
      %p148 = scmp.ne.s32.totalorder %s137, %s140
      %p149 = scmp.eq.s32.totalorder %s18, 1
      %p150 = por %p148, %p149
      %p151 = scmp.ne.s32.totalorder %s140, %s141
      %p152 = scmp.eq.s32.totalorder %s18, 0
      %p153 = por %p151, %p152
      %p154 = scmp.ne.s32.totalorder %s140, %s141
      %p155 = scmp.eq.s32.totalorder %s19, 1
      %p156 = por %p154, %p155
      %p158 = scmp.ne.s32.totalorder %s141, %s157
      %p159 = scmp.eq.s32.totalorder %s19, 0
      %p160 = por %p158, %p159
      %p161 = scmp.le.s32.totalorder 1, %s13
      %p162 = scmp.lt.s32.totalorder %s13, 3
      %p163 = pnand %p161, %p162
      %p164 = pneg %p163
      // Predicated region
      $region9: #{conv3x3_relu.1} parent=5 // pred_check
        _
      $region10: #{conv3x3_relu.1} parent=5 // pred_check_branch
        %166 = sbr.rel (%p163) target = $region12
      $region11: #{conv3x3_relu.1} parent=5 // pred_region
        %s167 = ssub.s32 %s13, 1
        // Predicated region
        $region13: #{conv3x3_relu.1} parent=11 // pred_check
          %p168 = pneg %p104
        $region14: #{conv3x3_relu.1} parent=11 // pred_check_branch
          %170 = sbr.rel (%p168) target = $region16
        $region15: #{conv3x3_relu.1} parent=11 // pred_region
          _
        $region16: #{conv3x3_relu.1} parent=11 // pred_fallthru
          _
        // Predicated region
        $region17: #{conv3x3_relu.1} parent=11 // pred_check
          %p171 = pneg %p125
        $region18: #{conv3x3_relu.1} parent=11 // pred_check_branch
          %173 = sbr.rel (%p171) target = $region20
        $region19: #{conv3x3_relu.1} parent=11 // pred_region
          _
        $region20: #{conv3x3_relu.1} parent=11 // pred_fallthru
          _
      $region12: #{conv3x3_relu.1} parent=5 // pred_fallthru
        _
      %p174 = scmp.lt.s32.totalorder %s13, 2
      // Predicated region
      $region21: #{conv3x3_relu.1} parent=5 // pred_check
        %p175 = pneg %p174
      $region22: #{conv3x3_relu.1} parent=5 // pred_check_branch
        %177 = sbr.rel (%p175) target = $region24
      $region23: #{conv3x3_relu.1} parent=5 // pred_region
        // Predicated region
        $region25: #{conv3x3_relu.1} parent=23 // pred_check
          %p178 = pneg %p47
        $region26: #{conv3x3_relu.1} parent=23 // pred_check_branch
          %180 = sbr.rel (%p178) target = $region28
        $region27: #{conv3x3_relu.1} parent=23 // pred_region
          %s181 = smul.u32 32, %s21
          %p182 = scmp.lt.s32.totalorder %s20, 1
          %s183 = scalar_select %p182, %s20, 1
          %p184 = scmp.lt.s32.totalorder %s181, 63
          %s185 = scalar_select %p184, %s181, 63
          %s186 = smul.addr %s183, 64
          %s187 = sadd.s32 %s185, %s186
          %s188 = smul.addr %s187, 4
          %s189 = scalar_lea.vmem %s0, %s188
          %s190 = smul.u32 32, %s21
        $region28: #{conv3x3_relu.1} parent=23 // pred_fallthru
          _
        // Predicated region
        $region29: #{conv3x3_relu.1} parent=23 // pred_check
          %p191 = pneg %p77
        $region30: #{conv3x3_relu.1} parent=23 // pred_check_branch
          %193 = sbr.rel (%p191) target = $region32
        $region31: #{conv3x3_relu.1} parent=23 // pred_region
          %s194 = sadd.s32 %s21, 1
          %s195 = smul.u32 32, %s194
          %p196 = scmp.lt.s32.totalorder %s20, 1
          %s197 = scalar_select %p196, %s20, 1
          %p198 = scmp.lt.s32.totalorder %s195, 63
          %s199 = scalar_select %p198, %s195, 63
          %s200 = smul.addr %s197, 64
          %s201 = sadd.s32 %s199, %s200
          %s202 = smul.addr %s201, 4
          %s203 = scalar_lea.vmem %s1, %s202
          %s204 = sadd.s32 %s21, 1
          %s205 = smul.u32 32, %s204
        $region32: #{conv3x3_relu.1} parent=23 // pred_fallthru
          _
      $region24: #{conv3x3_relu.1} parent=5 // pred_fallthru
        _
      %p206 = scmp.le.s32.totalorder 1, %s13
      %p207 = scmp.lt.s32.totalorder %s13, 3
      %p208 = pnand %p206, %p207
      %p209 = pneg %p208
      // Predicated region
      $region33: #{conv3x3_relu.1} parent=5 // pred_check
        _
      $region34: #{conv3x3_relu.1} parent=5 // pred_check_branch
        %211 = sbr.rel (%p208) target = $region36
      $region35: #{conv3x3_relu.1} parent=5 // pred_region
        %s212 = ssub.s32 %s13, 1
        %s213 = smul.u32 32, %s23
        %p214 = scmp.lt.s32.totalorder %s22, 1
        %s215 = scalar_select %p214, %s22, 1
        %p216 = scmp.lt.s32.totalorder %s213, 63
        %s217 = scalar_select %p216, %s213, 63
        %s218 = smul.addr %s215, 64
        %s219 = sadd.s32 %s217, %s218
        %s220 = smul.addr %s219, 4
        %s221 = scalar_lea.vmem %s0, %s220
        %p222 = pneg %p53
        %p223 = pneg %p50
        %s224 = sadd.s32 %s23, 1
        %s225 = smul.u32 32, %s224
        %p226 = scmp.lt.s32.totalorder %s22, 1
        %s227 = scalar_select %p226, %s22, 1
        %p228 = scmp.lt.s32.totalorder %s225, 63
        %s229 = scalar_select %p228, %s225, 63
        %s230 = smul.addr %s227, 64
        %s231 = sadd.s32 %s229, %s230
        %s232 = smul.addr %s231, 4
        %s233 = scalar_lea.vmem %s1, %s232
        %p234 = pneg %p83
        %p235 = pneg %p80
        %p236 = pneg %p104
        %p237 = pneg %p101
        %p238 = pneg %p125
        %p239 = pneg %p122
        %p240 = pneg %p153
        %p241 = pneg %p150
        %s242 = sand.u32 %s140, 1
        %s243 = scalar_lea.sflag [#allocation3], %s242
        %s244 = sand.u32 %s140, 1
        %s245 = smul.addr %s244, 128
        %s246 = scalar_lea.vmem [#allocation2], %s245
        %s247 = smul.u32 32, %s23
        %p248 = scmp.lt.s32.totalorder %s22, 1
        %s249 = scalar_select %p248, %s22, 1
        %p250 = scmp.lt.s32.totalorder %s247, 63
        %s251 = scalar_select %p250, %s247, 63
        %s252 = smul.addr %s249, 64
        %s253 = sadd.s32 %s251, %s252
        %s254 = smul.addr %s253, 4
        %s255 = scalar_lea.vmem %s0, %s254
        %s256 = smul.u32 32, %s23
        %s257 = sadd.s32 %s23, 1
        %s258 = smul.u32 32, %s257
        %p259 = scmp.lt.s32.totalorder %s22, 1
        %s260 = scalar_select %p259, %s22, 1
        %p261 = scmp.lt.s32.totalorder %s258, 63
        %s262 = scalar_select %p261, %s258, 63
        %s263 = smul.addr %s260, 64
        %s264 = sadd.s32 %s262, %s263
        %s265 = smul.addr %s264, 4
        %s266 = scalar_lea.vmem %s1, %s265
        %s267 = sadd.s32 %s23, 1
        %s268 = smul.u32 32, %s267
        %s269 = smul.u32 32, %s23
        %v271 = vld [vmem:[%s255] sm:$0xf]
        %v272 = vld [vmem:[%s255 + $0x4] sm:$0xf]
        %v273 = vld [vmem:[%s255 + $0x8] sm:$0xf]
        %v274 = vld [vmem:[%s255 + $0xc] sm:$0xf]
        %v275 = vld [vmem:[%s255 + $0x10] sm:$0xf]
        %v276 = vld [vmem:[%s255 + $0x14] sm:$0xf]
        %v277 = vld [vmem:[%s255 + $0x18] sm:$0xf]
        %v278 = vld [vmem:[%s255 + $0x1c] sm:$0xf]
        %v279 = vld [vmem:[%s255 + $0x20] sm:$0xf]
        %v280 = vld [vmem:[%s255 + $0x24] sm:$0xf]
        %v281 = vld [vmem:[%s255 + $0x28] sm:$0xf]
        %v282 = vld [vmem:[%s255 + $0x2c] sm:$0xf]
        %v283 = vld [vmem:[%s255 + $0x30] sm:$0xf]
        %v284 = vld [vmem:[%s255 + $0x34] sm:$0xf]
        %v285 = vld [vmem:[%s255 + $0x38] sm:$0xf]
        %v286 = vld [vmem:[%s255 + $0x3c] sm:$0xf]
        %v287 = vld [vmem:[%s255 + $0x40] sm:$0xf]
        %v288 = vld [vmem:[%s255 + $0x44] sm:$0xf]
        %v289 = vld [vmem:[%s255 + $0x48] sm:$0xf]
        %v290 = vld [vmem:[%s255 + $0x4c] sm:$0xf]
        %v291 = vld [vmem:[%s255 + $0x50] sm:$0xf]
        %v292 = vld [vmem:[%s255 + $0x54] sm:$0xf]
        %v293 = vld [vmem:[%s255 + $0x58] sm:$0xf]
        %v294 = vld [vmem:[%s255 + $0x5c] sm:$0xf]
        %v295 = vld [vmem:[%s255 + $0x60] sm:$0xf]
        %v296 = vld [vmem:[%s255 + $0x64] sm:$0xf]
        %v297 = vld [vmem:[%s255 + $0x68] sm:$0xf]
        %v298 = vld [vmem:[%s255 + $0x6c] sm:$0xf]
        %v299 = vld [vmem:[%s255 + $0x70] sm:$0xf]
        %v300 = vld [vmem:[%s255 + $0x74] sm:$0xf]
        %v301 = vld [vmem:[%s255 + $0x78] sm:$0xf]
        %v302 = vld [vmem:[%s255 + $0x7c] sm:$0xf]
        %v335 = vunpack.c.l.b16 %v271
        %v336 = vunpack.c.l.b16 %v272
        %v337 = vunpack.c.l.b16 %v273
        %v338 = vunpack.c.l.b16 %v274
        %v339 = vunpack.c.l.b16 %v275
        %v340 = vunpack.c.l.b16 %v276
        %v341 = vunpack.c.l.b16 %v277
        %v342 = vunpack.c.l.b16 %v278
        %v343 = vunpack.c.l.b16 %v279
        %v344 = vunpack.c.l.b16 %v280
        %v345 = vunpack.c.l.b16 %v281
        %v346 = vunpack.c.l.b16 %v282
        %v347 = vunpack.c.l.b16 %v283
        %v348 = vunpack.c.l.b16 %v284
        %v349 = vunpack.c.l.b16 %v285
        %v350 = vunpack.c.l.b16 %v286
        %v351 = vunpack.c.l.b16 %v287
        %v352 = vunpack.c.l.b16 %v288
        %v353 = vunpack.c.l.b16 %v289
        %v354 = vunpack.c.l.b16 %v290
        %v355 = vunpack.c.l.b16 %v291
        %v356 = vunpack.c.l.b16 %v292
        %v357 = vunpack.c.l.b16 %v293
        %v358 = vunpack.c.l.b16 %v294
        %v359 = vunpack.c.l.b16 %v295
        %v360 = vunpack.c.l.b16 %v296
        %v361 = vunpack.c.l.b16 %v297
        %v362 = vunpack.c.l.b16 %v298
        %v363 = vunpack.c.l.b16 %v299
        %v364 = vunpack.c.l.b16 %v300
        %v365 = vunpack.c.l.b16 %v301
        %v366 = vunpack.c.l.b16 %v302
        %v367 = vpack.c.b16 %v336, %v335
        %v368 = vpack.c.b16 %v338, %v337
        %v369 = vpack.c.b16 %v340, %v339
        %v370 = vpack.c.b16 %v342, %v341
        %v371 = vpack.c.b16 %v344, %v343
        %v372 = vpack.c.b16 %v346, %v345
        %v373 = vpack.c.b16 %v348, %v347
        %v374 = vpack.c.b16 %v350, %v349
        %v375 = vpack.c.b16 %v352, %v351
        %v376 = vpack.c.b16 %v354, %v353
        %v377 = vpack.c.b16 %v356, %v355
        %v378 = vpack.c.b16 %v358, %v357
        %v379 = vpack.c.b16 %v360, %v359
        %v380 = vpack.c.b16 %v362, %v361
        %v381 = vpack.c.b16 %v364, %v363
        %v382 = vpack.c.b16 %v366, %v365
        %v383 = vld [vmem:[%s2] sm:$0xf]
        %v384 = vld [vmem:[%s2 + $0x4] sm:$0xf]
        %v385 = vld [vmem:[%s2 + $0x8] sm:$0xf]
        %v386 = vld [vmem:[%s2 + $0xc] sm:$0x3]
        %v387 = vld [vmem:[%s3] sm:$0x1]
        %v389 = vlaneseq
        %v390 = vshrl.u32 %v389, 7
        %v391 = vsub.s32 0, %v390
        %v392 = vrot.slane %v387, %v391
        %v398 = vunpack.c.l.b16 %v383
        %v399 = vunpack.c.l.b16 %v384
        %v400 = vunpack.c.l.b16 %v385
        %v401 = vunpack.c.l.b16 %v386
        %v402 = vpack.c.b16 %v399, %v398
        %v403 = vpack.c.b16 %v401, %v400
        %vm405 = vcmask 220160
        %v407 = vsel %vm405, %v367, 0
        %v410 = vsel %vm405, %v368, 0
        %v413 = vsel %vm405, %v369, 0
        %v416 = vsel %vm405, %v370, 0
        %v419 = vsel %vm405, %v371, 0
        %v422 = vsel %vm405, %v372, 0
        %v425 = vsel %vm405, %v373, 0
        %v428 = vsel %vm405, %v374, 0
        %v431 = vsel %vm405, %v375, 0
        %v434 = vsel %vm405, %v376, 0
        %v437 = vsel %vm405, %v377, 0
        %v440 = vsel %vm405, %v378, 0
        %v443 = vsel %vm405, %v379, 0
        %v446 = vsel %vm405, %v380, 0
        %v449 = vsel %vm405, %v381, 0
        %v452 = vsel %vm405, %v382, 0
        %vm454 = vcmask 1044480
        %vm455 = vcmask 1045504
        %v456 = vsel %vm454, 4294967295, 65535
        %v457 = vsel %vm455, %v456, 0
        %v459 = vand.u32 %v403, %v457
        %461 = vmatprep.subr.bf16.mxu0 0
        %462 = vmatpush1.bf16.msra.mxu0 0
        %463 = vmatprep.subr.bf16.mxu0 0
        %464 = vmatpush1.bf16.msra.mxu0 0
        %465 = vmatprep.subr.bf16.mxu0 0
        %466 = vmatpush1.bf16.msra.mxu0 0
        %467 = vmatprep.subr.bf16.mxu0 0
        %468 = vmatpush1.bf16.msra.mxu0 0
        %469 = vmatprep.subr.bf16.mxu0 0
        %470 = vmatpush1.bf16.msra.mxu0 0
        %471 = vmatprep.subr.bf16.mxu0 0
        %472 = vmatpush1.bf16.msra.mxu0 0
        %473 = vmatprep.subr.bf16.mxu0 0
        %474 = vmatpush1.bf16.msra.mxu0 %v459
        %475 = vmatprep.subr.bf16.mxu0 0
        %476 = vmatpush1.bf16.msra.mxu0 %v402
        %477 = vmatprep.subr.bf16.mxu0 0
        %478 = vmatpush2.bf16.msra.mxu0 0
        %479 = vmatprep.subr.bf16.mxu0 0
        %480 = vmatpush2.bf16.msra.mxu0 0
        %481 = vmatprep.subr.bf16.mxu0 0
        %482 = vmatpush2.bf16.msra.mxu0 0
        %483 = vmatprep.subr.bf16.mxu0 0
        %484 = vmatpush2.bf16.msra.mxu0 0
        %485 = vmatprep.subr.bf16.mxu0 0
        %486 = vmatpush2.bf16.msra.mxu0 0
        %487 = vmatprep.subr.bf16.mxu0 0
        %488 = vmatpush2.bf16.msra.mxu0 0
        %489 = vmatprep.subr.bf16.mxu0 0
        %490 = vmatpush2.bf16.msra.mxu0 0
        %491 = vmatprep.subr.bf16.mxu0 0
        %492 = vmatpush2.bf16.msra.mxu0 0
        %493 = vmatprep.mubr.bf16.mxu0 0
        %494 = vmatmul.mubr.bf16.gmra.mxu0 %v407
        %v495 = vpop.f32.mrf.mxu0
        %v496 = vadd.f32 %v392, %v495
        %v497 = vpop.f32.mrf.mxu0
        %v498 = vpop.f32.mrf.mxu0
        %v499 = vadd.f32 %v392, %v498
        %v500 = vpop.f32.mrf.mxu0
        %501 = vmatprep.mubr.bf16.mxu0 0
        %502 = vmatmul.mubr.bf16.gmra.mxu0 %v410
        %v503 = vpop.f32.mrf.mxu0
        %v504 = vadd.f32 %v392, %v503
        %v505 = vpop.f32.mrf.mxu0
        %v506 = vpop.f32.mrf.mxu0
        %v507 = vadd.f32 %v392, %v506
        %v508 = vpop.f32.mrf.mxu0
        %509 = vmatprep.mubr.bf16.mxu0 0
        %510 = vmatmul.mubr.bf16.gmra.mxu0 %v413
        %v511 = vpop.f32.mrf.mxu0
        %v512 = vadd.f32 %v392, %v511
        %v513 = vpop.f32.mrf.mxu0
        %v514 = vpop.f32.mrf.mxu0
        %v515 = vadd.f32 %v392, %v514
        %v516 = vpop.f32.mrf.mxu0
        %517 = vmatprep.mubr.bf16.mxu0 0
        %518 = vmatmul.mubr.bf16.gmra.mxu0 %v416
        %v519 = vpop.f32.mrf.mxu0
        %v520 = vadd.f32 %v392, %v519
        %v521 = vpop.f32.mrf.mxu0
        %v522 = vpop.f32.mrf.mxu0
        %v523 = vadd.f32 %v392, %v522
        %v524 = vpop.f32.mrf.mxu0
        %525 = vmatprep.mubr.bf16.mxu0 0
        %526 = vmatmul.mubr.bf16.gmra.mxu0 %v419
        %v527 = vpop.f32.mrf.mxu0
        %v528 = vadd.f32 %v392, %v527
        %v529 = vpop.f32.mrf.mxu0
        %v530 = vpop.f32.mrf.mxu0
        %v531 = vadd.f32 %v392, %v530
        %v532 = vpop.f32.mrf.mxu0
        %533 = vmatprep.mubr.bf16.mxu0 0
        %534 = vmatmul.mubr.bf16.gmra.mxu0 %v422
        %v535 = vpop.f32.mrf.mxu0
        %v536 = vadd.f32 %v392, %v535
        %v537 = vpop.f32.mrf.mxu0
        %v538 = vpop.f32.mrf.mxu0
        %v539 = vadd.f32 %v392, %v538
        %v540 = vpop.f32.mrf.mxu0
        %541 = vmatprep.mubr.bf16.mxu0 0
        %542 = vmatmul.mubr.bf16.gmra.mxu0 %v425
        %v543 = vpop.f32.mrf.mxu0
        %v544 = vadd.f32 %v392, %v543
        %v545 = vpop.f32.mrf.mxu0
        %v546 = vpop.f32.mrf.mxu0
        %v547 = vadd.f32 %v392, %v546
        %v548 = vpop.f32.mrf.mxu0
        %549 = vmatprep.mubr.bf16.mxu0 0
        %550 = vmatmul.mubr.bf16.gmra.mxu0 %v428
        %v551 = vpop.f32.mrf.mxu0
        %v552 = vadd.f32 %v392, %v551
        %v553 = vpop.f32.mrf.mxu0
        %v554 = vpop.f32.mrf.mxu0
        %v555 = vadd.f32 %v392, %v554
        %v556 = vpop.f32.mrf.mxu0
        %557 = vmatprep.mubr.bf16.mxu0 0
        %558 = vmatmul.mubr.bf16.gmra.mxu0 %v431
        %v559 = vpop.f32.mrf.mxu0
        %v560 = vadd.f32 %v392, %v559
        %v561 = vpop.f32.mrf.mxu0
        %v562 = vpop.f32.mrf.mxu0
        %v563 = vadd.f32 %v392, %v562
        %v564 = vpop.f32.mrf.mxu0
        %565 = vmatprep.mubr.bf16.mxu0 0
        %566 = vmatmul.mubr.bf16.gmra.mxu0 %v434
        %v567 = vpop.f32.mrf.mxu0
        %v568 = vadd.f32 %v392, %v567
        %v569 = vpop.f32.mrf.mxu0
        %v570 = vpop.f32.mrf.mxu0
        %v571 = vadd.f32 %v392, %v570
        %v572 = vpop.f32.mrf.mxu0
        %573 = vmatprep.mubr.bf16.mxu0 0
        %574 = vmatmul.mubr.bf16.gmra.mxu0 %v437
        %v575 = vpop.f32.mrf.mxu0
        %v576 = vadd.f32 %v392, %v575
        %v577 = vpop.f32.mrf.mxu0
        %v578 = vpop.f32.mrf.mxu0
        %v579 = vadd.f32 %v392, %v578
        %v580 = vpop.f32.mrf.mxu0
        %581 = vmatprep.mubr.bf16.mxu0 0
        %582 = vmatmul.mubr.bf16.gmra.mxu0 %v440
        %v583 = vpop.f32.mrf.mxu0
        %v584 = vadd.f32 %v392, %v583
        %v585 = vpop.f32.mrf.mxu0
        %v586 = vpop.f32.mrf.mxu0
        %v587 = vadd.f32 %v392, %v586
        %v588 = vpop.f32.mrf.mxu0
        %589 = vmatprep.mubr.bf16.mxu0 0
        %590 = vmatmul.mubr.bf16.gmra.mxu0 %v443
        %v591 = vpop.f32.mrf.mxu0
        %v592 = vadd.f32 %v392, %v591
        %v593 = vpop.f32.mrf.mxu0
        %v594 = vpop.f32.mrf.mxu0
        %v595 = vadd.f32 %v392, %v594
        %v596 = vpop.f32.mrf.mxu0
        %597 = vmatprep.mubr.bf16.mxu0 0
        %598 = vmatmul.mubr.bf16.gmra.mxu0 %v446
        %v599 = vpop.f32.mrf.mxu0
        %v600 = vadd.f32 %v392, %v599
        %v601 = vpop.f32.mrf.mxu0
        %v602 = vpop.f32.mrf.mxu0
        %v603 = vadd.f32 %v392, %v602
        %v604 = vpop.f32.mrf.mxu0
        %605 = vmatprep.mubr.bf16.mxu0 0
        %606 = vmatmul.mubr.bf16.gmra.mxu0 %v449
        %v607 = vpop.f32.mrf.mxu0
        %v608 = vadd.f32 %v392, %v607
        %v609 = vpop.f32.mrf.mxu0
        %v610 = vpop.f32.mrf.mxu0
        %v611 = vadd.f32 %v392, %v610
        %v612 = vpop.f32.mrf.mxu0
        %613 = vmatprep.mubr.bf16.mxu0 0
        %614 = vmatmul.mubr.bf16.gmra.mxu0 %v452
        %v615 = vpop.f32.mrf.mxu0
        %v616 = vadd.f32 %v392, %v615
        %v617 = vpop.f32.mrf.mxu0
        %v618 = vpop.f32.mrf.mxu0
        %v619 = vadd.f32 %v392, %v618
        %v620 = vpop.f32.mrf.mxu0
        %621 = vdwg.mxu0
        %v622 = vmax.f32 %v496, 0.0
        %v623 = vmax.f32 %v499, 0.0
        %v624 = vmax.f32 %v504, 0.0
        %v625 = vmax.f32 %v507, 0.0
        %v626 = vmax.f32 %v512, 0.0
        %v627 = vmax.f32 %v515, 0.0
        %v628 = vmax.f32 %v520, 0.0
        %v629 = vmax.f32 %v523, 0.0
        %v630 = vmax.f32 %v528, 0.0
        %v631 = vmax.f32 %v531, 0.0
        %v632 = vmax.f32 %v536, 0.0
        %v633 = vmax.f32 %v539, 0.0
        %v634 = vmax.f32 %v544, 0.0
        %v635 = vmax.f32 %v547, 0.0
        %v636 = vmax.f32 %v552, 0.0
        %v637 = vmax.f32 %v555, 0.0
        %v638 = vmax.f32 %v560, 0.0
        %v639 = vmax.f32 %v563, 0.0
        %v640 = vmax.f32 %v568, 0.0
        %v641 = vmax.f32 %v571, 0.0
        %v642 = vmax.f32 %v576, 0.0
        %v643 = vmax.f32 %v579, 0.0
        %v644 = vmax.f32 %v584, 0.0
        %v645 = vmax.f32 %v587, 0.0
        %v646 = vmax.f32 %v592, 0.0
        %v647 = vmax.f32 %v595, 0.0
        %v648 = vmax.f32 %v600, 0.0
        %v649 = vmax.f32 %v603, 0.0
        %v650 = vmax.f32 %v608, 0.0
        %v651 = vmax.f32 %v611, 0.0
        %v652 = vmax.f32 %v616, 0.0
        %v653 = vmax.f32 %v619, 0.0
        %v654 = vpack.c.bf16 %v623, %v622
        %v655 = vpack.c.bf16 %v625, %v624
        %v656 = vpack.c.bf16 %v627, %v626
        %v657 = vpack.c.bf16 %v629, %v628
        %v658 = vpack.c.bf16 %v631, %v630
        %v659 = vpack.c.bf16 %v633, %v632
        %v660 = vpack.c.bf16 %v635, %v634
        %v661 = vpack.c.bf16 %v637, %v636
        %v662 = vpack.c.bf16 %v639, %v638
        %v663 = vpack.c.bf16 %v641, %v640
        %v664 = vpack.c.bf16 %v643, %v642
        %v665 = vpack.c.bf16 %v645, %v644
        %v666 = vpack.c.bf16 %v647, %v646
        %v667 = vpack.c.bf16 %v649, %v648
        %v668 = vpack.c.bf16 %v651, %v650
        %v669 = vpack.c.bf16 %v653, %v652
        %v686 = vunpack.c.l.b16 %v654
        %v687 = vunpack.c.h.b16 %v654
        %v688 = vunpack.c.l.b16 %v655
        %v689 = vunpack.c.h.b16 %v655
        %v690 = vunpack.c.l.b16 %v656
        %v691 = vunpack.c.h.b16 %v656
        %v692 = vunpack.c.l.b16 %v657
        %v693 = vunpack.c.h.b16 %v657
        %v694 = vunpack.c.l.b16 %v658
        %v695 = vunpack.c.h.b16 %v658
        %v696 = vunpack.c.l.b16 %v659
        %v697 = vunpack.c.h.b16 %v659
        %v698 = vunpack.c.l.b16 %v660
        %v699 = vunpack.c.h.b16 %v660
        %v700 = vunpack.c.l.b16 %v661
        %v701 = vunpack.c.h.b16 %v661
        %v702 = vunpack.c.l.b16 %v662
        %v703 = vunpack.c.h.b16 %v662
        %v704 = vunpack.c.l.b16 %v663
        %v705 = vunpack.c.h.b16 %v663
        %v706 = vunpack.c.l.b16 %v664
        %v707 = vunpack.c.h.b16 %v664
        %v708 = vunpack.c.l.b16 %v665
        %v709 = vunpack.c.h.b16 %v665
        %v710 = vunpack.c.l.b16 %v666
        %v711 = vunpack.c.h.b16 %v666
        %v712 = vunpack.c.l.b16 %v667
        %v713 = vunpack.c.h.b16 %v667
        %v714 = vunpack.c.l.b16 %v668
        %v715 = vunpack.c.h.b16 %v668
        %v716 = vunpack.c.l.b16 %v669
        %v717 = vunpack.c.h.b16 %v669
        %v718 = vpack.c.b16 %v686, %v686
        %v719 = vpack.c.b16 %v687, %v687
        %v720 = vpack.c.b16 %v688, %v688
        %v721 = vpack.c.b16 %v689, %v689
        %v722 = vpack.c.b16 %v690, %v690
        %v723 = vpack.c.b16 %v691, %v691
        %v724 = vpack.c.b16 %v692, %v692
        %v725 = vpack.c.b16 %v693, %v693
        %v726 = vpack.c.b16 %v694, %v694
        %v727 = vpack.c.b16 %v695, %v695
        %v728 = vpack.c.b16 %v696, %v696
        %v729 = vpack.c.b16 %v697, %v697
        %v730 = vpack.c.b16 %v698, %v698
        %v731 = vpack.c.b16 %v699, %v699
        %v732 = vpack.c.b16 %v700, %v700
        %v733 = vpack.c.b16 %v701, %v701
        %v734 = vpack.c.b16 %v702, %v702
        %v735 = vpack.c.b16 %v703, %v703
        %v736 = vpack.c.b16 %v704, %v704
        %v737 = vpack.c.b16 %v705, %v705
        %v738 = vpack.c.b16 %v706, %v706
        %v739 = vpack.c.b16 %v707, %v707
        %v740 = vpack.c.b16 %v708, %v708
        %v741 = vpack.c.b16 %v709, %v709
        %v742 = vpack.c.b16 %v710, %v710
        %v743 = vpack.c.b16 %v711, %v711
        %v744 = vpack.c.b16 %v712, %v712
        %v745 = vpack.c.b16 %v713, %v713
        %v746 = vpack.c.b16 %v714, %v714
        %v747 = vpack.c.b16 %v715, %v715
        %v748 = vpack.c.b16 %v716, %v716
        %v749 = vpack.c.b16 %v717, %v717
        %vm782 = vcmask 519168
        %783 = vst.msk [vmem:[%s246] sm:$0xf] %vm782, %v718
        %784 = vst.msk [vmem:[%s246 + $0x4] sm:$0xf] %vm782, %v719
        %785 = vst.msk [vmem:[%s246 + $0x8] sm:$0xf] %vm782, %v720
        %786 = vst.msk [vmem:[%s246 + $0xc] sm:$0xf] %vm782, %v721
        %787 = vst.msk [vmem:[%s246 + $0x10] sm:$0xf] %vm782, %v722
        %788 = vst.msk [vmem:[%s246 + $0x14] sm:$0xf] %vm782, %v723
        %789 = vst.msk [vmem:[%s246 + $0x18] sm:$0xf] %vm782, %v724
        %790 = vst.msk [vmem:[%s246 + $0x1c] sm:$0xf] %vm782, %v725
        %791 = vst.msk [vmem:[%s246 + $0x20] sm:$0xf] %vm782, %v726
        %792 = vst.msk [vmem:[%s246 + $0x24] sm:$0xf] %vm782, %v727
        %793 = vst.msk [vmem:[%s246 + $0x28] sm:$0xf] %vm782, %v728
        %794 = vst.msk [vmem:[%s246 + $0x2c] sm:$0xf] %vm782, %v729
        %795 = vst.msk [vmem:[%s246 + $0x30] sm:$0xf] %vm782, %v730
        %796 = vst.msk [vmem:[%s246 + $0x34] sm:$0xf] %vm782, %v731
        %797 = vst.msk [vmem:[%s246 + $0x38] sm:$0xf] %vm782, %v732
        %798 = vst.msk [vmem:[%s246 + $0x3c] sm:$0xf] %vm782, %v733
        %799 = vst.msk [vmem:[%s246 + $0x40] sm:$0xf] %vm782, %v734
        %800 = vst.msk [vmem:[%s246 + $0x44] sm:$0xf] %vm782, %v735
        %801 = vst.msk [vmem:[%s246 + $0x48] sm:$0xf] %vm782, %v736
        %802 = vst.msk [vmem:[%s246 + $0x4c] sm:$0xf] %vm782, %v737
        %803 = vst.msk [vmem:[%s246 + $0x50] sm:$0xf] %vm782, %v738
        %804 = vst.msk [vmem:[%s246 + $0x54] sm:$0xf] %vm782, %v739
        %805 = vst.msk [vmem:[%s246 + $0x58] sm:$0xf] %vm782, %v740
        %806 = vst.msk [vmem:[%s246 + $0x5c] sm:$0xf] %vm782, %v741
        %807 = vst.msk [vmem:[%s246 + $0x60] sm:$0xf] %vm782, %v742
        %808 = vst.msk [vmem:[%s246 + $0x64] sm:$0xf] %vm782, %v743
        %809 = vst.msk [vmem:[%s246 + $0x68] sm:$0xf] %vm782, %v744
        %810 = vst.msk [vmem:[%s246 + $0x6c] sm:$0xf] %vm782, %v745
        %811 = vst.msk [vmem:[%s246 + $0x70] sm:$0xf] %vm782, %v746
        %812 = vst.msk [vmem:[%s246 + $0x74] sm:$0xf] %vm782, %v747
        %813 = vst.msk [vmem:[%s246 + $0x78] sm:$0xf] %vm782, %v748
        %814 = vst.msk [vmem:[%s246 + $0x7c] sm:$0xf] %vm782, %v749
        %s815 = sand.u32 %s140, 1
        %s816 = scalar_lea.sflag [#allocation3], %s815
        %s817 = sand.u32 %s140, 1
        %s818 = smul.addr %s817, 128
        %s819 = scalar_lea.vmem [#allocation2], %s818
        // Predicated region
        $region37: #{conv3x3_relu.1} parent=35 // pred_check
          %p820 = pneg %p150
        $region38: #{conv3x3_relu.1} parent=35 // pred_check_branch
          %822 = sbr.rel (%p820) target = $region40
        $region39: #{conv3x3_relu.1} parent=35 // pred_region
          %s823 = smul.u32 32, %s23
          %s825 = ssub.s32 2048, 2048
          %826 = vsyncadd %s816, %s825
          %s827 = smul.addr %s22, 32
          %s828 = sadd.s32 %s823, %s827
          %s829 = smul.addr %s828, 64
          %s830 = scalar_lea.hbm %s4, %s829
          %s831 = sshll.u32 %s819, 4
          %s832 = int_to_ptr.vmem [resolvable:$true] %s831
          %837 = dma.vmem_to_hbm [thread:$0]  %s832, 2048, %s830, %s816, 64, 64, 4
        $region40: #{conv3x3_relu.1} parent=35 // pred_fallthru
          _
      $region36: #{conv3x3_relu.1} parent=5 // pred_fallthru
        _
      %p838 = scmp.le.s32.totalorder 2, %s13
      // Predicated region
      $region41: #{conv3x3_relu.1} parent=5 // pred_check
        %p839 = pneg %p838
      $region42: #{conv3x3_relu.1} parent=5 // pred_check_branch
        %841 = sbr.rel (%p839) target = $region44
      $region43: #{conv3x3_relu.1} parent=5 // pred_region
        %s842 = ssub.s32 %s13, 2
        // Predicated region
        $region45: #{conv3x3_relu.1} parent=43 // pred_check
          %p843 = pneg %p156
        $region46: #{conv3x3_relu.1} parent=43 // pred_check_branch
          %845 = sbr.rel (%p843) target = $region48
        $region47: #{conv3x3_relu.1} parent=43 // pred_region
          %s846 = sand.u32 %s141, 1
          %s847 = scalar_lea.sflag [#allocation3], %s846
          %s848 = sand.u32 %s141, 1
          %s849 = smul.addr %s848, 128
          %s850 = scalar_lea.vmem [#allocation2], %s849
          %851 = dma.done %s847, 2048
        $region48: #{conv3x3_relu.1} parent=43 // pred_fallthru
          _
      $region44: #{conv3x3_relu.1} parent=5 // pred_fallthru
        _
    $region6: #{conv3x3_relu.1} parent=1 // loop_footer
      %s17 = sadd.s32 1, %s13
    $region7: #{conv3x3_relu.1} parent=1 // loop_footer_branch
      %12 = sbr.rel target = $region3
    $region8: #{conv3x3_relu.1} parent=1 // loop_exit
      _
    %852 = vsyncpa [#allocation3], 1
    %s853 = scalar_lea.sflag [#allocation3], 1
    %854 = vsyncpa %s853, 1

</llo_original>
